<compile_context>
chip_gen: v7x
topology: tpu7x:2x2x1
jax: 0.10.0
libtpu: 0.0.40
codegen_flags: <defaults>
</compile_context>

<pallas_src>
import jax
import jax.numpy as jnp
from jax.experimental import pallas as pl
from jax.experimental.pallas import tpu as pltpu

# ----- model hyper-parameters (match the PyTorch script) -----
CONTEXT_SIZE = 3
EMBED_SIZE = 50
HIDDEN_SIZE = 128
VOCAB_SIZE = 1000

_NEG_BIG = -1e30  # finite "minus infinity" for padded vocab columns


def _round_up(n, m):
    return ((n + m - 1) // m) * m


def nplm_kernel(x_ref, w1_ref, b1_ref, w2_ref, b2_ref, out_ref):
    """One batch tile of the NPLM forward.

    x_ref  : (TB, F_pad)     f32 or bf16  (zero padded features)
    w1_ref : (F_pad, H)      f32 or bf16  (zero padded rows)
    b1_ref : (1, H)          f32
    w2_ref : (H, V_pad)      f32 or bf16  (zero padded cols)
    b2_ref : (1, V_pad)      f32          (-1e30 in padded cols)
    out_ref: (TB, V_pad)     f32          log-probabilities
    """
    x = x_ref[...]
    w1 = w1_ref[...]
    w2 = w2_ref[...]

    # hidden_output = tanh(x @ W1 + b1)   (MXU, f32 accumulation; tanh -> EUP)
    h = jnp.tanh(
        jnp.dot(x, w1, preferred_element_type=jnp.float32) + b1_ref[...]
    ).astype(w2.dtype)

    # output_scores = h @ W2 + b2; padded cols get -1e30 from b2.
    scores = jnp.dot(h, w2, preferred_element_type=jnp.float32) + b2_ref[...]

    # numerically stable log_softmax over the (padded) vocab axis.
    # Padded columns are ~-1e30, so they never win the max and exp() underflows to 0.
    m = jnp.max(scores, axis=-1, keepdims=True)
    z = scores - m
    lse = jnp.log(jnp.sum(jnp.exp(z), axis=-1, keepdims=True))
    out_ref[...] = (z - lse).astype(out_ref.dtype)


def nplm_forward(context_words, emb_table, w1, b1, w2, b2, *, use_bf16=False):
    """context_words: (B, CONTEXT_SIZE) int32 token ids. Returns (B, VOCAB_SIZE) f32 log-probs."""
    B = context_words.shape[0]
    F = CONTEXT_SIZE * EMBED_SIZE          # 150
    H = HIDDEN_SIZE                        # 128
    V = VOCAB_SIZE                         # 1000
    F_pad = _round_up(F, 128)              # 256 (lane-aligned K for MXU)
    V_pad = _round_up(V, 128)              # 1024 (lane-dense output)

    # Embedding lookup + flatten (glue, matches embeds.view(B, -1) in PyTorch).
    x = jnp.take(emb_table, context_words, axis=0).reshape(B, F)

    # Batch tiling: 128-row blocks once the batch is large enough; tiny batches
    # are padded to a multiple of 8 and processed as a single block.
    if B >= 128:
        TB = 128
    else:
        TB = _round_up(max(B, 1), 8)
    B_pad = _round_up(B, TB)
    grid = (B_pad // TB,)

    cdt = jnp.bfloat16 if use_bf16 else jnp.float32

    # Zero-pad activations/weights (mathematical no-op); -1e30 in padded vocab bias.
    x_p = jnp.zeros((B_pad, F_pad), cdt).at[:B, :F].set(x.astype(cdt))
    w1_p = jnp.zeros((F_pad, H), cdt).at[:F, :].set(w1.astype(cdt))
    b1_p = b1.reshape(1, H).astype(jnp.float32)
    w2_p = jnp.zeros((H, V_pad), cdt).at[:, :V].set(w2.astype(cdt))
    b2_p = (
        jnp.full((1, V_pad), _NEG_BIG, jnp.float32)
        .at[:, :V]
        .set(b2.reshape(1, V).astype(jnp.float32))
    )

    flops = 2 * B_pad * (F_pad * H + H * V_pad)
    transcendentals = B_pad * (H + V_pad + 1)          # tanh + exp + log
    bytes_accessed = (
        x_p.size * x_p.dtype.itemsize
        + w1_p.size * w1_p.dtype.itemsize
        + b1_p.size * b1_p.dtype.itemsize
        + w2_p.size * w2_p.dtype.itemsize
        + b2_p.size * b2_p.dtype.itemsize
        + B_pad * V_pad * 4
    )

    out = pl.pallas_call(
        nplm_kernel,
        out_shape=jax.ShapeDtypeStruct((B_pad, V_pad), jnp.float32),
        grid_spec=pltpu.PrefetchScalarGridSpec(
            num_scalar_prefetch=0,
            grid=grid,
            in_specs=[
                pl.BlockSpec((TB, F_pad), lambda i: (i, 0)),   # x: per-batch-tile
                pl.BlockSpec((F_pad, H), lambda i: (0, 0)),    # W1: VMEM-resident
                pl.BlockSpec((1, H), lambda i: (0, 0)),        # b1
                pl.BlockSpec((H, V_pad), lambda i: (0, 0)),    # W2: VMEM-resident
                pl.BlockSpec((1, V_pad), lambda i: (0, 0)),    # b2
            ],
            out_specs=pl.BlockSpec((TB, V_pad), lambda i: (i, 0)),
        ),
        compiler_params=pltpu.CompilerParams(
            dimension_semantics=("parallel",),                 # v7x: shard batch over 2 TCs
        ),
        cost_estimate=pl.CostEstimate(
            flops=flops,
            transcendentals=transcendentals,
            bytes_accessed=bytes_accessed,
        ),
    )(x_p, w1_p, b1_p, w2_p, b2_p)

    # Strip batch / vocab padding.
    return out[:B, :V]


def init_params(key):
    """Deterministic parameter init mimicking PyTorch defaults."""
    k_emb, k_w1, k_b1, k_w2, k_b2 = jax.random.split(key, 5)

    # nn.Embedding: N(0, 1)
    emb_table = jax.random.normal(k_emb, (VOCAB_SIZE, EMBED_SIZE), jnp.float32)

    # nn.Linear: U(-1/sqrt(fan_in), 1/sqrt(fan_in)); stored as (in, out)
    fan1 = CONTEXT_SIZE * EMBED_SIZE
    lim1 = 1.0 / jnp.sqrt(fan1)
    w1 = jax.random.uniform(k_w1, (fan1, HIDDEN_SIZE), jnp.float32, -lim1, lim1)
    b1 = jax.random.uniform(k_b1, (1, HIDDEN_SIZE), jnp.float32, -lim1, lim1)

    fan2 = HIDDEN_SIZE
    lim2 = 1.0 / jnp.sqrt(fan2)
    w2 = jax.random.uniform(k_w2, (fan2, VOCAB_SIZE), jnp.float32, -lim2, lim2)
    b2 = jax.random.uniform(k_b2, (1, VOCAB_SIZE), jnp.float32, -lim2, lim2)

    return emb_table, w1, b1, w2, b2


def nplm_reference(context_words, emb_table, w1, b1, w2, b2):
    """Pure-JAX reference of the PyTorch forward for correctness checking."""
    B = context_words.shape[0]
    x = jnp.take(emb_table, context_words, axis=0).reshape(B, -1)
    h = jnp.tanh(x @ w1 + b1)
    s = h @ w2 + b2
    return jax.nn.log_softmax(s, axis=1)


if __name__ == "__main__":
    key = jax.random.PRNGKey(0)
    emb_table, w1, b1, w2, b2 = init_params(key)

    # Same example inputs as the PyTorch script: batch=2, context_size=3
    context_words = jnp.array([[12, 34, 56], [78, 90, 12]], dtype=jnp.int32)

    ref = nplm_reference(context_words, emb_table, w1, b1, w2, b2)

    # f32 path (exactness check vs pure-JAX reference)
    log_probs = nplm_forward(context_words, emb_table, w1, b1, w2, b2, use_bf16=False)
    log_probs = jax.block_until_ready(log_probs)
    assert log_probs.shape == (2, VOCAB_SIZE)
    assert jnp.allclose(log_probs, ref, atol=1e-4, rtol=1e-4), "f32 mismatch vs reference"

    # bf16 compute path (v6e/v7x MXU-friendly), f32 accumulation + f32 log_softmax
    log_probs_bf16 = nplm_forward(context_words, emb_table, w1, b1, w2, b2, use_bf16=True)
    log_probs_bf16 = jax.block_until_ready(log_probs_bf16)
    assert log_probs_bf16.shape == (2, VOCAB_SIZE)
    assert jnp.allclose(log_probs_bf16, ref, atol=5e-2), "bf16 mismatch vs reference"

    print("KERNEL_OK")
</pallas_src>

<mosaic_0001>
module attributes {stable_mosaic.version = 11 : i64} {
  func.func @nplm_kernel(%arg0: i32, %arg1: memref<8x256xf32, #tpu.memory_space<vmem>>, %arg2: memref<256x128xf32, #tpu.memory_space<vmem>>, %arg3: memref<1x128xf32, #tpu.memory_space<vmem>>, %arg4: memref<128x1024xf32, #tpu.memory_space<vmem>>, %arg5: memref<1x1024xf32, #tpu.memory_space<vmem>>, %arg6: memref<8x1024xf32, #tpu.memory_space<vmem>>) attributes {dimension_semantics = [#tpu.dimension_semantics<parallel>], iteration_bounds = array<i64: 1>, scalar_prefetch = 0 : i64, scratch_operands = 0 : i64, tpu.core_type = #tpu.core_type<tc>, window_params = [{transform_indices = @transform_0, window_bounds = array<i64: 8, 256>}, {pipeline_mode = #tpu.pipeline_mode<synchronous>, transform_indices = @transform_1, window_bounds = array<i64: 256, 128>}, {pipeline_mode = #tpu.pipeline_mode<synchronous>, transform_indices = @transform_2, window_bounds = array<i64: 1, 128>}, {pipeline_mode = #tpu.pipeline_mode<synchronous>, transform_indices = @transform_3, window_bounds = array<i64: 128, 1024>}, {pipeline_mode = #tpu.pipeline_mode<synchronous>, transform_indices = @transform_4, window_bounds = array<i64: 1, 1024>}, {transform_indices = @transform_5, window_bounds = array<i64: 8, 1024>}]} {
    %c0 = arith.constant 0 : index
    %c0_0 = arith.constant 0 : index
    %0 = vector.load %arg1[%c0, %c0_0] : memref<8x256xf32, #tpu.memory_space<vmem>>, vector<8x256xf32>
    %c0_1 = arith.constant 0 : index
    %c0_2 = arith.constant 0 : index
    %1 = vector.load %arg2[%c0_1, %c0_2] : memref<256x128xf32, #tpu.memory_space<vmem>>, vector<256x128xf32>
    %c0_3 = arith.constant 0 : index
    %c0_4 = arith.constant 0 : index
    %2 = vector.load %arg4[%c0_3, %c0_4] : memref<128x1024xf32, #tpu.memory_space<vmem>>, vector<128x1024xf32>
    %cst = arith.constant dense<0.000000e+00> : vector<8x128xf32>
    %3 = tpu.matmul %0, %1, %cst {dimension_numbers = #tpu.dot_dimension_numbers<[1], [0], [0], [1], [0, 0, 1, 1], [], []>} : vector<8x256xf32>, vector<256x128xf32>, vector<8x128xf32> -> vector<8x128xf32>
    %c0_5 = arith.constant 0 : index
    %c0_6 = arith.constant 0 : index
    %4 = vector.load %arg3[%c0_5, %c0_6] : memref<1x128xf32, #tpu.memory_space<vmem>>, vector<1x128xf32>
    %5 = vector.broadcast %4 : vector<1x128xf32> to vector<8x128xf32>
    %6 = arith.addf %3, %5 : vector<8x128xf32>
    %7 = math.tanh %6 : vector<8x128xf32>
    %cst_7 = arith.constant dense<0.000000e+00> : vector<8x1024xf32>
    %8 = tpu.matmul %7, %2, %cst_7 {dimension_numbers = #tpu.dot_dimension_numbers<[1], [0], [0], [1], [0, 0, 1, 1], [], []>} : vector<8x128xf32>, vector<128x1024xf32>, vector<8x1024xf32> -> vector<8x1024xf32>
    %c0_8 = arith.constant 0 : index
    %c0_9 = arith.constant 0 : index
    %9 = vector.load %arg5[%c0_8, %c0_9] : memref<1x1024xf32, #tpu.memory_space<vmem>>, vector<1x1024xf32>
    %10 = vector.broadcast %9 : vector<1x1024xf32> to vector<8x1024xf32>
    %11 = arith.addf %8, %10 : vector<8x1024xf32>
    %cst_10 = arith.constant dense<0xFF800000> : vector<8xf32>
    %12 = vector.multi_reduction <maximumf>, %11, %cst_10 [1] : vector<8x1024xf32> to vector<8xf32>
    %13 = vector.shape_cast %12 : vector<8xf32> to vector<8x1xf32>
    %14 = vector.broadcast %13 : vector<8x1xf32> to vector<8x1024xf32>
    %15 = arith.subf %11, %14 : vector<8x1024xf32>
    %16 = math.exp %15 : vector<8x1024xf32>
    %cst_11 = arith.constant dense<0.000000e+00> : vector<8xf32>
    %17 = vector.multi_reduction <add>, %16, %cst_11 [1] : vector<8x1024xf32> to vector<8xf32>
    %18 = vector.shape_cast %17 : vector<8xf32> to vector<8x1xf32>
    %19 = math.log %18 : vector<8x1xf32>
    %20 = vector.broadcast %19 : vector<8x1xf32> to vector<8x1024xf32>
    %21 = arith.subf %15, %20 : vector<8x1024xf32>
    %c0_12 = arith.constant 0 : index
    %c0_13 = arith.constant 0 : index
    %22 = vector.load %arg6[%c0_12, %c0_13] : memref<8x1024xf32, #tpu.memory_space<vmem>>, vector<8x1024xf32>
    tpu.vector_store %arg6[%c0_12, %c0_13], %21 {strides = array<i32>} : memref<8x1024xf32, #tpu.memory_space<vmem>>, vector<8x1024xf32>,
    return
  }
  func.func @transform_0(%arg0: i32) -> (i32, i32) {
    %c0_i32 = arith.constant 0 : i32
    %c0_i32_0 = arith.constant 0 : i32
    return %arg0, %c0_i32 : i32, i32
  }
  func.func @transform_1(%arg0: i32) -> (i32, i32) {
    %c0_i32 = arith.constant 0 : i32
    %c0_i32_0 = arith.constant 0 : i32
    %c0_i32_1 = arith.constant 0 : i32
    return %c0_i32, %c0_i32_0 : i32, i32
  }
  func.func @transform_2(%arg0: i32) -> (i32, i32) {
    %c0_i32 = arith.constant 0 : i32
    %c0_i32_0 = arith.constant 0 : i32
    %c0_i32_1 = arith.constant 0 : i32
    return %c0_i32, %c0_i32_0 : i32, i32
  }
  func.func @transform_3(%arg0: i32) -> (i32, i32) {
    %c0_i32 = arith.constant 0 : i32
    %c0_i32_0 = arith.constant 0 : i32
    %c0_i32_1 = arith.constant 0 : i32
    return %c0_i32, %c0_i32_0 : i32, i32
  }
  func.func @transform_4(%arg0: i32) -> (i32, i32) {
    %c0_i32 = arith.constant 0 : i32
    %c0_i32_0 = arith.constant 0 : i32
    %c0_i32_1 = arith.constant 0 : i32
    return %c0_i32, %c0_i32_0 : i32, i32
  }
  func.func @transform_5(%arg0: i32) -> (i32, i32) {
    %c0_i32 = arith.constant 0 : i32
    %c0_i32_0 = arith.constant 0 : i32
    return %arg0, %c0_i32 : i32, i32
  }
}

</mosaic_0001>

<llo_original>
// kernel: tpu_custom_call.1
$region0: #{tpu_custom_call.1}
  #allocation0 [shape = 'u32[]', space=smem, size = 0x4, offset = 0x4, fixed_abs, tag = 'smem constant byte address 0x4 - core index']
  #allocation1 [shape = 'u32[144,128]{1,0:T(1,128)}', space=vmem, size = 0x12000, scoped, tag = 'internal scratch']
  %s0 = inlined_call_operand.hbm [shape: f32[8,256], index: 0, kind: input, shape index: {}]
  %s1 = inlined_call_operand.hbm [shape: f32[256,128], index: 1, kind: input, shape index: {}]
  %s2 = inlined_call_operand.vmem [shape: f32[1,128], index: 2, kind: input, shape index: {}]
  %s3 = inlined_call_operand.hbm [shape: f32[128,1024], index: 3, kind: input, shape index: {}]
  %s4 = inlined_call_operand.vmem [shape: f32[1,1024], index: 4, kind: input, shape index: {}]
  %s5 = inlined_call_operand.hbm [shape: f32[8,1024], index: 5, kind: output, shape index: {}]
  %s6 = sld [smem:[#allocation0]]
  $region42: #{tpu_custom_call.1} parent=0
    _
  %s8 = ssub.s32 1, %s6
  %s9 = scalar_select 0, %s8, %s6
  $region1: #{tpu_custom_call.1} parent=0
    #allocation2 [shape = 'u8[8192]{0}', space=vmem, size = 0x2000, scoped, tag = 'input window, operand 0, single buffered']
    #allocation3 [shape = 's32[1]{0}', space=sflag, size = 0x4, scoped, tag = 'scoped memory for tpu_custom_call.1']
    #allocation4 [shape = 's32[1]{0}', space=sflag, size = 0x4, scoped, tag = 'scoped memory for tpu_custom_call.1']
    #allocation5 [shape = 'u8[131072]{0}', space=vmem, size = 0x20000, scoped, tag = 'input window, operand 1, single buffered']
    #allocation6 [shape = 's32[1]{0}', space=sflag, size = 0x4, scoped, tag = 'scoped memory for tpu_custom_call.1']
    #allocation7 [shape = 'u8[524288]{0}', space=vmem, size = 0x80000, scoped, tag = 'input window, operand 3, single buffered']
    #allocation8 [shape = 'u8[32768]{0}', space=vmem, size = 0x8000, scoped, tag = 'output window, operand 0, single buffered']
    %10 = vsyncpa [#allocation3], 0
    %11 = vsyncpa [#allocation6], 0
    %12 = vsyncpa [#allocation4], 0
    // Predicated region
    $region2: #{tpu_custom_call.1} parent=1 // pred_check
      _
    $region3: #{tpu_custom_call.1} parent=1 // pred_check_branch
      %14 = sbr.rel (0) target = $region5
    $region4: #{tpu_custom_call.1} parent=1 // pred_region
      %s16 = ssub.s32 256, 256
      %17 = vsyncadd [#allocation3], %s16
      %s19 = sshll.u32 [#allocation2], 4
      %s20 = int_to_ptr.vmem [resolvable:$true] %s19
      %22 = dma.hbm_to_vmem [thread:$0]  %s0, 256, %s20, [#allocation3]
    $region5: #{tpu_custom_call.1} parent=1 // pred_fallthru
      _
    // Predicated region
    $region6: #{tpu_custom_call.1} parent=1 // pred_check
      _
    $region7: #{tpu_custom_call.1} parent=1 // pred_check_branch
      %24 = sbr.rel (0) target = $region9
    $region8: #{tpu_custom_call.1} parent=1 // pred_region
      %s26 = ssub.s32 4096, 4096
      %27 = vsyncadd [#allocation6], %s26
      %s28 = sshll.u32 [#allocation5], 4
      %s29 = int_to_ptr.vmem [resolvable:$true] %s28
      %34 = dma.hbm_to_vmem [thread:$0]  %s1, 4096, %s29, [#allocation6], 128, 128, 8
    $region9: #{tpu_custom_call.1} parent=1 // pred_fallthru
      _
    // Predicated region
    $region10: #{tpu_custom_call.1} parent=1 // pred_check
      _
    $region11: #{tpu_custom_call.1} parent=1 // pred_check_branch
      %36 = sbr.rel (0) target = $region13
    $region12: #{tpu_custom_call.1} parent=1 // pred_region
      _
    $region13: #{tpu_custom_call.1} parent=1 // pred_fallthru
      _
    // Predicated region
    $region14: #{tpu_custom_call.1} parent=1 // pred_check
      _
    $region15: #{tpu_custom_call.1} parent=1 // pred_check_branch
      %38 = sbr.rel (0) target = $region17
    $region16: #{tpu_custom_call.1} parent=1 // pred_region
      %s40 = ssub.s32 16384, 16384
      %41 = vsyncadd [#allocation6], %s40
      %s42 = sshll.u32 [#allocation7], 4
      %s43 = int_to_ptr.vmem [resolvable:$true] %s42
      %48 = dma.hbm_to_vmem [thread:$0]  %s3, 16384, %s43, [#allocation6], 1024, 1024, 64
    $region17: #{tpu_custom_call.1} parent=1 // pred_fallthru
      _
    // Predicated region
    $region18: #{tpu_custom_call.1} parent=1 // pred_check
      _
    $region19: #{tpu_custom_call.1} parent=1 // pred_check_branch
      %50 = sbr.rel (0) target = $region21
    $region20: #{tpu_custom_call.1} parent=1 // pred_region
      _
    $region21: #{tpu_custom_call.1} parent=1 // pred_fallthru
      _
    // Predicated region
    $region22: #{tpu_custom_call.1} parent=1 // pred_check
      _
    $region23: #{tpu_custom_call.1} parent=1 // pred_check_branch
      %52 = sbr.rel (0) target = $region25
    $region24: #{tpu_custom_call.1} parent=1 // pred_region
      %53 = dma.done [#allocation3], 256
    $region25: #{tpu_custom_call.1} parent=1 // pred_fallthru
      _
    // Predicated region
    $region26: #{tpu_custom_call.1} parent=1 // pred_check
      _
    $region27: #{tpu_custom_call.1} parent=1 // pred_check_branch
      %55 = sbr.rel (0) target = $region29
    $region28: #{tpu_custom_call.1} parent=1 // pred_region
      %56 = dma.done [#allocation6], 4096
    $region29: #{tpu_custom_call.1} parent=1 // pred_fallthru
      _
    // Predicated region
    $region30: #{tpu_custom_call.1} parent=1 // pred_check
      _
    $region31: #{tpu_custom_call.1} parent=1 // pred_check_branch
      %58 = sbr.rel (0) target = $region33
    $region32: #{tpu_custom_call.1} parent=1 // pred_region
      %59 = dma.done [#allocation6], 16384
    $region33: #{tpu_custom_call.1} parent=1 // pred_fallthru
      _
    %v60 = vld [vmem:[#allocation2] sm:$0xff]
    %v61 = vld [vmem:[#allocation2 + $0x8] sm:$0xff]
    %v62 = vld [vmem:[#allocation5] sm:$0xff]
    %v63 = vld [vmem:[#allocation5 + $0x8] sm:$0xff]
    %v64 = vld [vmem:[#allocation5 + $0x10] sm:$0xff]
    %v65 = vld [vmem:[#allocation5 + $0x18] sm:$0xff]
    %v66 = vld [vmem:[#allocation5 + $0x20] sm:$0xff]
    %v67 = vld [vmem:[#allocation5 + $0x28] sm:$0xff]
    %v68 = vld [vmem:[#allocation5 + $0x30] sm:$0xff]
    %v69 = vld [vmem:[#allocation5 + $0x38] sm:$0xff]
    %v70 = vld [vmem:[#allocation5 + $0x40] sm:$0xff]
    %v71 = vld [vmem:[#allocation5 + $0x48] sm:$0xff]
    %v72 = vld [vmem:[#allocation5 + $0x50] sm:$0xff]
    %v73 = vld [vmem:[#allocation5 + $0x58] sm:$0xff]
    %v74 = vld [vmem:[#allocation5 + $0x60] sm:$0xff]
    %v75 = vld [vmem:[#allocation5 + $0x68] sm:$0xff]
    %v76 = vld [vmem:[#allocation5 + $0x70] sm:$0xff]
    %v77 = vld [vmem:[#allocation5 + $0x78] sm:$0xff]
    %v78 = vld [vmem:[#allocation5 + $0x80] sm:$0xff]
    %v79 = vld [vmem:[#allocation5 + $0x88] sm:$0xff]
    %v80 = vld [vmem:[#allocation5 + $0x90] sm:$0xff]
    %v81 = vld [vmem:[#allocation5 + $0x98] sm:$0xff]
    %v82 = vld [vmem:[#allocation5 + $0xa0] sm:$0xff]
    %v83 = vld [vmem:[#allocation5 + $0xa8] sm:$0xff]
    %v84 = vld [vmem:[#allocation5 + $0xb0] sm:$0xff]
    %v85 = vld [vmem:[#allocation5 + $0xb8] sm:$0xff]
    %v86 = vld [vmem:[#allocation5 + $0xc0] sm:$0xff]
    %v87 = vld [vmem:[#allocation5 + $0xc8] sm:$0xff]
    %v88 = vld [vmem:[#allocation5 + $0xd0] sm:$0xff]
    %v89 = vld [vmem:[#allocation5 + $0xd8] sm:$0xff]
    %v90 = vld [vmem:[#allocation5 + $0xe0] sm:$0xff]
    %v91 = vld [vmem:[#allocation5 + $0xe8] sm:$0xff]
    %v92 = vld [vmem:[#allocation5 + $0xf0] sm:$0xff]
    %v93 = vld [vmem:[#allocation5 + $0xf8] sm:$0xff]
    %v94 = vld [vmem:[#allocation7] sm:$0xff]
    %v95 = vld [vmem:[#allocation7 + $0x8] sm:$0xff]
    %v96 = vld [vmem:[#allocation7 + $0x10] sm:$0xff]
    %v97 = vld [vmem:[#allocation7 + $0x18] sm:$0xff]
    %v98 = vld [vmem:[#allocation7 + $0x20] sm:$0xff]
    %v99 = vld [vmem:[#allocation7 + $0x28] sm:$0xff]
    %v100 = vld [vmem:[#allocation7 + $0x30] sm:$0xff]
    %v101 = vld [vmem:[#allocation7 + $0x38] sm:$0xff]
    %v102 = vld [vmem:[#allocation7 + $0x40] sm:$0xff]
    %v103 = vld [vmem:[#allocation7 + $0x48] sm:$0xff]
    %v104 = vld [vmem:[#allocation7 + $0x50] sm:$0xff]
    %v105 = vld [vmem:[#allocation7 + $0x58] sm:$0xff]
    %v106 = vld [vmem:[#allocation7 + $0x60] sm:$0xff]
    %v107 = vld [vmem:[#allocation7 + $0x68] sm:$0xff]
    %v108 = vld [vmem:[#allocation7 + $0x70] sm:$0xff]
    %v109 = vld [vmem:[#allocation7 + $0x78] sm:$0xff]
    %v110 = vld [vmem:[#allocation7 + $0x80] sm:$0xff]
    %v111 = vld [vmem:[#allocation7 + $0x88] sm:$0xff]
    %v112 = vld [vmem:[#allocation7 + $0x90] sm:$0xff]
    %v113 = vld [vmem:[#allocation7 + $0x98] sm:$0xff]
    %v114 = vld [vmem:[#allocation7 + $0xa0] sm:$0xff]
    %v115 = vld [vmem:[#allocation7 + $0xa8] sm:$0xff]
    %v116 = vld [vmem:[#allocation7 + $0xb0] sm:$0xff]
    %v117 = vld [vmem:[#allocation7 + $0xb8] sm:$0xff]
    %v118 = vld [vmem:[#allocation7 + $0xc0] sm:$0xff]
    %v119 = vld [vmem:[#allocation7 + $0xc8] sm:$0xff]
    %v120 = vld [vmem:[#allocation7 + $0xd0] sm:$0xff]
    %v121 = vld [vmem:[#allocation7 + $0xd8] sm:$0xff]
    %v122 = vld [vmem:[#allocation7 + $0xe0] sm:$0xff]
    %v123 = vld [vmem:[#allocation7 + $0xe8] sm:$0xff]
    %v124 = vld [vmem:[#allocation7 + $0xf0] sm:$0xff]
    %v125 = vld [vmem:[#allocation7 + $0xf8] sm:$0xff]
    %v126 = vld [vmem:[#allocation7 + $0x100] sm:$0xff]
    %v127 = vld [vmem:[#allocation7 + $0x108] sm:$0xff]
    %v128 = vld [vmem:[#allocation7 + $0x110] sm:$0xff]
    %v129 = vld [vmem:[#allocation7 + $0x118] sm:$0xff]
    %v130 = vld [vmem:[#allocation7 + $0x120] sm:$0xff]
    %v131 = vld [vmem:[#allocation7 + $0x128] sm:$0xff]
    %v132 = vld [vmem:[#allocation7 + $0x130] sm:$0xff]
    %v133 = vld [vmem:[#allocation7 + $0x138] sm:$0xff]
    %v134 = vld [vmem:[#allocation7 + $0x140] sm:$0xff]
    %v135 = vld [vmem:[#allocation7 + $0x148] sm:$0xff]
    %v136 = vld [vmem:[#allocation7 + $0x150] sm:$0xff]
    %v137 = vld [vmem:[#allocation7 + $0x158] sm:$0xff]
    %v138 = vld [vmem:[#allocation7 + $0x160] sm:$0xff]
    %v139 = vld [vmem:[#allocation7 + $0x168] sm:$0xff]
    %v140 = vld [vmem:[#allocation7 + $0x170] sm:$0xff]
    %v141 = vld [vmem:[#allocation7 + $0x178] sm:$0xff]
    %v142 = vld [vmem:[#allocation7 + $0x180] sm:$0xff]
    %v143 = vld [vmem:[#allocation7 + $0x188] sm:$0xff]
    %v144 = vld [vmem:[#allocation7 + $0x190] sm:$0xff]
    %v145 = vld [vmem:[#allocation7 + $0x198] sm:$0xff]
    %v146 = vld [vmem:[#allocation7 + $0x1a0] sm:$0xff]
    %v147 = vld [vmem:[#allocation7 + $0x1a8] sm:$0xff]
    %v148 = vld [vmem:[#allocation7 + $0x1b0] sm:$0xff]
    %v149 = vld [vmem:[#allocation7 + $0x1b8] sm:$0xff]
    %v150 = vld [vmem:[#allocation7 + $0x1c0] sm:$0xff]
    %v151 = vld [vmem:[#allocation7 + $0x1c8] sm:$0xff]
    %v152 = vld [vmem:[#allocation7 + $0x1d0] sm:$0xff]
    %v153 = vld [vmem:[#allocation7 + $0x1d8] sm:$0xff]
    %v154 = vld [vmem:[#allocation7 + $0x1e0] sm:$0xff]
    %v155 = vld [vmem:[#allocation7 + $0x1e8] sm:$0xff]
    %v156 = vld [vmem:[#allocation7 + $0x1f0] sm:$0xff]
    %v157 = vld [vmem:[#allocation7 + $0x1f8] sm:$0xff]
    %v158 = vld [vmem:[#allocation7 + $0x200] sm:$0xff]
    %v159 = vld [vmem:[#allocation7 + $0x208] sm:$0xff]
    %v160 = vld [vmem:[#allocation7 + $0x210] sm:$0xff]
    %v161 = vld [vmem:[#allocation7 + $0x218] sm:$0xff]
    %v162 = vld [vmem:[#allocation7 + $0x220] sm:$0xff]
    %v163 = vld [vmem:[#allocation7 + $0x228] sm:$0xff]
    %v164 = vld [vmem:[#allocation7 + $0x230] sm:$0xff]
    %v165 = vld [vmem:[#allocation7 + $0x238] sm:$0xff]
    %v166 = vld [vmem:[#allocation7 + $0x240] sm:$0xff]
    %v167 = vld [vmem:[#allocation7 + $0x248] sm:$0xff]
    %v168 = vld [vmem:[#allocation7 + $0x250] sm:$0xff]
    %v169 = vld [vmem:[#allocation7 + $0x258] sm:$0xff]
    %v170 = vld [vmem:[#allocation7 + $0x260] sm:$0xff]
    %v171 = vld [vmem:[#allocation7 + $0x268] sm:$0xff]
    %v172 = vld [vmem:[#allocation7 + $0x270] sm:$0xff]
    %v173 = vld [vmem:[#allocation7 + $0x278] sm:$0xff]
    %v174 = vld [vmem:[#allocation7 + $0x280] sm:$0xff]
    %v175 = vld [vmem:[#allocation7 + $0x288] sm:$0xff]
    %v176 = vld [vmem:[#allocation7 + $0x290] sm:$0xff]
    %v177 = vld [vmem:[#allocation7 + $0x298] sm:$0xff]
    %v178 = vld [vmem:[#allocation7 + $0x2a0] sm:$0xff]
    %v179 = vld [vmem:[#allocation7 + $0x2a8] sm:$0xff]
    %v180 = vld [vmem:[#allocation7 + $0x2b0] sm:$0xff]
    %v181 = vld [vmem:[#allocation7 + $0x2b8] sm:$0xff]
    %v182 = vld [vmem:[#allocation7 + $0x2c0] sm:$0xff]
    %v183 = vld [vmem:[#allocation7 + $0x2c8] sm:$0xff]
    %v184 = vld [vmem:[#allocation7 + $0x2d0] sm:$0xff]
    %v185 = vld [vmem:[#allocation7 + $0x2d8] sm:$0xff]
    %v186 = vld [vmem:[#allocation7 + $0x2e0] sm:$0xff]
    %v187 = vld [vmem:[#allocation7 + $0x2e8] sm:$0xff]
    %v188 = vld [vmem:[#allocation7 + $0x2f0] sm:$0xff]
    %v189 = vld [vmem:[#allocation7 + $0x2f8] sm:$0xff]
    %v190 = vld [vmem:[#allocation7 + $0x300] sm:$0xff]
    %v191 = vld [vmem:[#allocation7 + $0x308] sm:$0xff]
    %v192 = vld [vmem:[#allocation7 + $0x310] sm:$0xff]
    %v193 = vld [vmem:[#allocation7 + $0x318] sm:$0xff]
    %v194 = vld [vmem:[#allocation7 + $0x320] sm:$0xff]
    %v195 = vld [vmem:[#allocation7 + $0x328] sm:$0xff]
    %v196 = vld [vmem:[#allocation7 + $0x330] sm:$0xff]
    %v197 = vld [vmem:[#allocation7 + $0x338] sm:$0xff]
    %v198 = vld [vmem:[#allocation7 + $0x340] sm:$0xff]
    %v199 = vld [vmem:[#allocation7 + $0x348] sm:$0xff]
    %v200 = vld [vmem:[#allocation7 + $0x350] sm:$0xff]
    %v201 = vld [vmem:[#allocation7 + $0x358] sm:$0xff]
    %v202 = vld [vmem:[#allocation7 + $0x360] sm:$0xff]
    %v203 = vld [vmem:[#allocation7 + $0x368] sm:$0xff]
    %v204 = vld [vmem:[#allocation7 + $0x370] sm:$0xff]
    %v205 = vld [vmem:[#allocation7 + $0x378] sm:$0xff]
    %v206 = vld [vmem:[#allocation7 + $0x380] sm:$0xff]
    %v207 = vld [vmem:[#allocation7 + $0x388] sm:$0xff]
    %v208 = vld [vmem:[#allocation7 + $0x390] sm:$0xff]
    %v209 = vld [vmem:[#allocation7 + $0x398] sm:$0xff]
    %v210 = vld [vmem:[#allocation7 + $0x3a0] sm:$0xff]
    %v211 = vld [vmem:[#allocation7 + $0x3a8] sm:$0xff]
    %v212 = vld [vmem:[#allocation7 + $0x3b0] sm:$0xff]
    %v213 = vld [vmem:[#allocation7 + $0x3b8] sm:$0xff]
    %v214 = vld [vmem:[#allocation7 + $0x3c0] sm:$0xff]
    %v215 = vld [vmem:[#allocation7 + $0x3c8] sm:$0xff]
    %v216 = vld [vmem:[#allocation7 + $0x3d0] sm:$0xff]
    %v217 = vld [vmem:[#allocation7 + $0x3d8] sm:$0xff]
    %v218 = vld [vmem:[#allocation7 + $0x3e0] sm:$0xff]
    %v219 = vld [vmem:[#allocation7 + $0x3e8] sm:$0xff]
    %v220 = vld [vmem:[#allocation7 + $0x3f0] sm:$0xff]
    %v221 = vld [vmem:[#allocation7 + $0x3f8] sm:$0xff]
    %v222 = vld [vmem:[%s2] sm:$0x1]
    %v224 = vlaneseq
    %v225 = vshrl.u32 %v224, 7
    %v226 = vsub.s32 0, %v225
    %v227 = vrot.slane %v222, %v226
    %229 = vmatprep.subr.mxu0 0.0
    %230 = vmatpush1.msra.mxu0 %v62
    %231 = vmatprep.subr.mxu0 0.0
    %232 = vmatpush1.msra.mxu0 %v63
    %233 = vmatprep.subr.mxu0 0.0
    %234 = vmatpush1.msra.mxu0 %v64
    %235 = vmatprep.subr.mxu0 0.0
    %236 = vmatpush1.msra.mxu0 %v65
    %237 = vmatprep.subr.mxu0 0.0
    %238 = vmatpush1.msra.mxu0 %v66
    %239 = vmatprep.subr.mxu0 0.0
    %240 = vmatpush1.msra.mxu0 %v67
    %241 = vmatprep.subr.mxu0 0.0
    %242 = vmatpush1.msra.mxu0 %v68
    %243 = vmatprep.subr.mxu0 0.0
    %244 = vmatpush1.msra.mxu0 %v69
    %245 = vmatprep.subr.mxu0 0.0
    %246 = vmatpush1.msra.mxu0 %v70
    %247 = vmatprep.subr.mxu0 0.0
    %248 = vmatpush1.msra.mxu0 %v71
    %249 = vmatprep.subr.mxu0 0.0
    %250 = vmatpush1.msra.mxu0 %v72
    %251 = vmatprep.subr.mxu0 0.0
    %252 = vmatpush1.msra.mxu0 %v73
    %253 = vmatprep.subr.mxu0 0.0
    %254 = vmatpush1.msra.mxu0 %v74
    %255 = vmatprep.subr.mxu0 0.0
    %256 = vmatpush1.msra.mxu0 %v75
    %257 = vmatprep.subr.mxu0 0.0
    %258 = vmatpush1.msra.mxu0 %v76
    %259 = vmatprep.subr.mxu0 0.0
    %260 = vmatpush1.msra.mxu0 %v77
    %261 = vmatprep.subr.mxu0 0.0
    %262 = vmatpush1.msra.mxu0 %v78
    %263 = vmatprep.subr.mxu0 0.0
    %264 = vmatpush1.msra.mxu0 %v79
    %265 = vmatprep.subr.mxu0 0.0
    %266 = vmatpush1.msra.mxu0 %v80
    %267 = vmatprep.subr.mxu0 0.0
    %268 = vmatpush1.msra.mxu0 %v81
    %269 = vmatprep.subr.mxu0 0.0
    %270 = vmatpush1.msra.mxu0 %v82
    %271 = vmatprep.subr.mxu0 0.0
    %272 = vmatpush1.msra.mxu0 %v83
    %273 = vmatprep.subr.mxu0 0.0
    %274 = vmatpush1.msra.mxu0 %v84
    %275 = vmatprep.subr.mxu0 0.0
    %276 = vmatpush1.msra.mxu0 %v85
    %277 = vmatprep.subr.mxu0 0.0
    %278 = vmatpush1.msra.mxu0 %v86
    %279 = vmatprep.subr.mxu0 0.0
    %280 = vmatpush1.msra.mxu0 %v87
    %281 = vmatprep.subr.mxu0 0.0
    %282 = vmatpush1.msra.mxu0 %v88
    %283 = vmatprep.subr.mxu0 0.0
    %284 = vmatpush1.msra.mxu0 %v89
    %285 = vmatprep.subr.mxu0 0.0
    %286 = vmatpush1.msra.mxu0 %v90
    %287 = vmatprep.subr.mxu0 0.0
    %288 = vmatpush1.msra.mxu0 %v91
    %289 = vmatprep.subr.mxu0 0.0
    %290 = vmatpush1.msra.mxu0 %v92
    %291 = vmatprep.subr.mxu0 0.0
    %292 = vmatpush1.msra.mxu0 %v93
    %293 = vmatprep.mubr.f32.mxu0 %v61
    %294 = vmatmul.mubr.f32.gmra.mrb[0].mxu0 %v60
    %v295 = vpop.f32.mrb[0].mxu0
    %v296 = vadd.f32 %v227, %v295
    %v297 = vpop.f32.mrb[0].mxu0
    %298 = vdwg.mxu0
    %v299 = vtanh.pop %v296
    %v300 = vld [vmem:[%s4] sm:$0xff]
    %v302 = vlaneseq
    %v303 = vshrl.u32 %v302, 7
    %v304 = vsub.s32 0, %v303
    %v305 = vrot.slane %v300, %v304
    %v306 = vlaneseq
    %v307 = vshrl.u32 %v306, 7
    %v308 = vsub.s32 1, %v307
    %v309 = vrot.slane %v300, %v308
    %v310 = vlaneseq
    %v311 = vshrl.u32 %v310, 7
    %v312 = vsub.s32 2, %v311
    %v313 = vrot.slane %v300, %v312
    %v314 = vlaneseq
    %v315 = vshrl.u32 %v314, 7
    %v316 = vsub.s32 3, %v315
    %v317 = vrot.slane %v300, %v316
    %v318 = vlaneseq
    %v319 = vshrl.u32 %v318, 7
    %v320 = vsub.s32 4, %v319
    %v321 = vrot.slane %v300, %v320
    %v322 = vlaneseq
    %v323 = vshrl.u32 %v322, 7
    %v324 = vsub.s32 5, %v323
    %v325 = vrot.slane %v300, %v324
    %v326 = vlaneseq
    %v327 = vshrl.u32 %v326, 7
    %v328 = vsub.s32 6, %v327
    %v329 = vrot.slane %v300, %v328
    %v330 = vlaneseq
    %v331 = vshrl.u32 %v330, 7
    %v332 = vsub.s32 7, %v331
    %v333 = vrot.slane %v300, %v332
    %342 = vmatprep.subr.mxu0 %v95
    %343 = vmatpush1.msra.mxu0 %v94
    %344 = vmatprep.subr.mxu0 %v103
    %345 = vmatpush1.msra.mxu0 %v102
    %346 = vmatprep.subr.mxu0 %v111
    %347 = vmatpush1.msra.mxu0 %v110
    %348 = vmatprep.subr.mxu0 %v119
    %349 = vmatpush1.msra.mxu0 %v118
    %350 = vmatprep.subr.mxu0 %v127
    %351 = vmatpush1.msra.mxu0 %v126
    %352 = vmatprep.subr.mxu0 %v135
    %353 = vmatpush1.msra.mxu0 %v134
    %354 = vmatprep.subr.mxu0 %v143
    %355 = vmatpush1.msra.mxu0 %v142
    %356 = vmatprep.subr.mxu0 %v151
    %357 = vmatpush1.msra.mxu0 %v150
    %358 = vmatprep.subr.mxu0 %v159
    %359 = vmatpush1.msra.mxu0 %v158
    %360 = vmatprep.subr.mxu0 %v167
    %361 = vmatpush1.msra.mxu0 %v166
    %362 = vmatprep.subr.mxu0 %v175
    %363 = vmatpush1.msra.mxu0 %v174
    %364 = vmatprep.subr.mxu0 %v183
    %365 = vmatpush1.msra.mxu0 %v182
    %366 = vmatprep.subr.mxu0 %v191
    %367 = vmatpush1.msra.mxu0 %v190
    %368 = vmatprep.subr.mxu0 %v199
    %369 = vmatpush1.msra.mxu0 %v198
    %370 = vmatprep.subr.mxu0 %v207
    %371 = vmatpush1.msra.mxu0 %v206
    %372 = vmatprep.subr.mxu0 %v215
    %373 = vmatpush1.msra.mxu0 %v214
    %374 = vmatprep.subr.mxu0 0.0
    %375 = vmatpush1.msra.mxu0 0.0
    %376 = vmatprep.subr.mxu0 0.0
    %377 = vmatpush1.msra.mxu0 0.0
    %378 = vmatprep.subr.mxu0 0.0
    %379 = vmatpush1.msra.mxu0 0.0
    %380 = vmatprep.subr.mxu0 0.0
    %381 = vmatpush1.msra.mxu0 0.0
    %382 = vmatprep.subr.mxu0 0.0
    %383 = vmatpush1.msra.mxu0 0.0
    %384 = vmatprep.subr.mxu0 0.0
    %385 = vmatpush1.msra.mxu0 0.0
    %386 = vmatprep.subr.mxu0 0.0
    %387 = vmatpush1.msra.mxu0 0.0
    %388 = vmatprep.subr.mxu0 0.0
    %389 = vmatpush1.msra.mxu0 0.0
    %390 = vmatprep.subr.mxu0 0.0
    %391 = vmatpush1.msra.mxu0 0.0
    %392 = vmatprep.subr.mxu0 0.0
    %393 = vmatpush1.msra.mxu0 0.0
    %394 = vmatprep.subr.mxu0 0.0
    %395 = vmatpush1.msra.mxu0 0.0
    %396 = vmatprep.subr.mxu0 0.0
    %397 = vmatpush1.msra.mxu0 0.0
    %398 = vmatprep.subr.mxu0 0.0
    %399 = vmatpush1.msra.mxu0 0.0
    %400 = vmatprep.subr.mxu0 0.0
    %401 = vmatpush1.msra.mxu0 0.0
    %402 = vmatprep.subr.mxu0 0.0
    %403 = vmatpush1.msra.mxu0 0.0
    %404 = vmatprep.subr.mxu0 0.0
    %405 = vmatpush1.msra.mxu0 0.0
    %406 = vmatprep.mubr.f32.mxu0 0.0
    %407 = vmatmul.mubr.f32.gmra.mrb[0].mxu0 %v299
    %v408 = vpop.f32.mrb[0].mxu0
    %v409 = vadd.f32 %v305, %v408
    %v410 = vpop.f32.mrb[0].mxu0
    %v411 = vadd.f32 %v309, %v410
    %412 = vdwg.mxu0
    %413 = vmatprep.subr.mxu0 %v97
    %414 = vmatpush1.msra.mxu0 %v96
    %415 = vmatprep.subr.mxu0 %v105
    %416 = vmatpush1.msra.mxu0 %v104
    %417 = vmatprep.subr.mxu0 %v113
    %418 = vmatpush1.msra.mxu0 %v112
    %419 = vmatprep.subr.mxu0 %v121
    %420 = vmatpush1.msra.mxu0 %v120
    %421 = vmatprep.subr.mxu0 %v129
    %422 = vmatpush1.msra.mxu0 %v128
    %423 = vmatprep.subr.mxu0 %v137
    %424 = vmatpush1.msra.mxu0 %v136
    %425 = vmatprep.subr.mxu0 %v145
    %426 = vmatpush1.msra.mxu0 %v144
    %427 = vmatprep.subr.mxu0 %v153
    %428 = vmatpush1.msra.mxu0 %v152
    %429 = vmatprep.subr.mxu0 %v161
    %430 = vmatpush1.msra.mxu0 %v160
    %431 = vmatprep.subr.mxu0 %v169
    %432 = vmatpush1.msra.mxu0 %v168
    %433 = vmatprep.subr.mxu0 %v177
    %434 = vmatpush1.msra.mxu0 %v176
    %435 = vmatprep.subr.mxu0 %v185
    %436 = vmatpush1.msra.mxu0 %v184
    %437 = vmatprep.subr.mxu0 %v193
    %438 = vmatpush1.msra.mxu0 %v192
    %439 = vmatprep.subr.mxu0 %v201
    %440 = vmatpush1.msra.mxu0 %v200
    %441 = vmatprep.subr.mxu0 %v209
    %442 = vmatpush1.msra.mxu0 %v208
    %443 = vmatprep.subr.mxu0 %v217
    %444 = vmatpush1.msra.mxu0 %v216
    %445 = vmatprep.subr.mxu0 0.0
    %446 = vmatpush1.msra.mxu0 0.0
    %447 = vmatprep.subr.mxu0 0.0
    %448 = vmatpush1.msra.mxu0 0.0
    %449 = vmatprep.subr.mxu0 0.0
    %450 = vmatpush1.msra.mxu0 0.0
    %451 = vmatprep.subr.mxu0 0.0
    %452 = vmatpush1.msra.mxu0 0.0
    %453 = vmatprep.subr.mxu0 0.0
    %454 = vmatpush1.msra.mxu0 0.0
    %455 = vmatprep.subr.mxu0 0.0
    %456 = vmatpush1.msra.mxu0 0.0
    %457 = vmatprep.subr.mxu0 0.0
    %458 = vmatpush1.msra.mxu0 0.0
    %459 = vmatprep.subr.mxu0 0.0
    %460 = vmatpush1.msra.mxu0 0.0
    %461 = vmatprep.subr.mxu0 0.0
    %462 = vmatpush1.msra.mxu0 0.0
    %463 = vmatprep.subr.mxu0 0.0
    %464 = vmatpush1.msra.mxu0 0.0
    %465 = vmatprep.subr.mxu0 0.0
    %466 = vmatpush1.msra.mxu0 0.0
    %467 = vmatprep.subr.mxu0 0.0
    %468 = vmatpush1.msra.mxu0 0.0
    %469 = vmatprep.subr.mxu0 0.0
    %470 = vmatpush1.msra.mxu0 0.0
    %471 = vmatprep.subr.mxu0 0.0
    %472 = vmatpush1.msra.mxu0 0.0
    %473 = vmatprep.subr.mxu0 0.0
    %474 = vmatpush1.msra.mxu0 0.0
    %475 = vmatprep.subr.mxu0 0.0
    %476 = vmatpush1.msra.mxu0 0.0
    %477 = vmatprep.mubr.f32.mxu0 0.0
    %478 = vmatmul.mubr.f32.gmra.mrb[0].mxu0 %v299
    %v479 = vpop.f32.mrb[0].mxu0
    %v480 = vadd.f32 %v313, %v479
    %v481 = vpop.f32.mrb[0].mxu0
    %v482 = vadd.f32 %v317, %v481
    %483 = vdwg.mxu0
    %484 = vmatprep.subr.mxu0 %v99
    %485 = vmatpush1.msra.mxu0 %v98
    %486 = vmatprep.subr.mxu0 %v107
    %487 = vmatpush1.msra.mxu0 %v106
    %488 = vmatprep.subr.mxu0 %v115
    %489 = vmatpush1.msra.mxu0 %v114
    %490 = vmatprep.subr.mxu0 %v123
    %491 = vmatpush1.msra.mxu0 %v122
    %492 = vmatprep.subr.mxu0 %v131
    %493 = vmatpush1.msra.mxu0 %v130
    %494 = vmatprep.subr.mxu0 %v139
    %495 = vmatpush1.msra.mxu0 %v138
    %496 = vmatprep.subr.mxu0 %v147
    %497 = vmatpush1.msra.mxu0 %v146
    %498 = vmatprep.subr.mxu0 %v155
    %499 = vmatpush1.msra.mxu0 %v154
    %500 = vmatprep.subr.mxu0 %v163
    %501 = vmatpush1.msra.mxu0 %v162
    %502 = vmatprep.subr.mxu0 %v171
    %503 = vmatpush1.msra.mxu0 %v170
    %504 = vmatprep.subr.mxu0 %v179
    %505 = vmatpush1.msra.mxu0 %v178
    %506 = vmatprep.subr.mxu0 %v187
    %507 = vmatpush1.msra.mxu0 %v186
    %508 = vmatprep.subr.mxu0 %v195
    %509 = vmatpush1.msra.mxu0 %v194
    %510 = vmatprep.subr.mxu0 %v203
    %511 = vmatpush1.msra.mxu0 %v202
    %512 = vmatprep.subr.mxu0 %v211
    %513 = vmatpush1.msra.mxu0 %v210
    %514 = vmatprep.subr.mxu0 %v219
    %515 = vmatpush1.msra.mxu0 %v218
    %516 = vmatprep.subr.mxu0 0.0
    %517 = vmatpush1.msra.mxu0 0.0
    %518 = vmatprep.subr.mxu0 0.0
    %519 = vmatpush1.msra.mxu0 0.0
    %520 = vmatprep.subr.mxu0 0.0
    %521 = vmatpush1.msra.mxu0 0.0
    %522 = vmatprep.subr.mxu0 0.0
    %523 = vmatpush1.msra.mxu0 0.0
    %524 = vmatprep.subr.mxu0 0.0
    %525 = vmatpush1.msra.mxu0 0.0
    %526 = vmatprep.subr.mxu0 0.0
    %527 = vmatpush1.msra.mxu0 0.0
    %528 = vmatprep.subr.mxu0 0.0
    %529 = vmatpush1.msra.mxu0 0.0
    %530 = vmatprep.subr.mxu0 0.0
    %531 = vmatpush1.msra.mxu0 0.0
    %532 = vmatprep.subr.mxu0 0.0
    %533 = vmatpush1.msra.mxu0 0.0
    %534 = vmatprep.subr.mxu0 0.0
    %535 = vmatpush1.msra.mxu0 0.0
    %536 = vmatprep.subr.mxu0 0.0
    %537 = vmatpush1.msra.mxu0 0.0
    %538 = vmatprep.subr.mxu0 0.0
    %539 = vmatpush1.msra.mxu0 0.0
    %540 = vmatprep.subr.mxu0 0.0
    %541 = vmatpush1.msra.mxu0 0.0
    %542 = vmatprep.subr.mxu0 0.0
    %543 = vmatpush1.msra.mxu0 0.0
    %544 = vmatprep.subr.mxu0 0.0
    %545 = vmatpush1.msra.mxu0 0.0
    %546 = vmatprep.subr.mxu0 0.0
    %547 = vmatpush1.msra.mxu0 0.0
    %548 = vmatprep.mubr.f32.mxu0 0.0
    %549 = vmatmul.mubr.f32.gmra.mrb[0].mxu0 %v299
    %v550 = vpop.f32.mrb[0].mxu0
    %v551 = vadd.f32 %v321, %v550
    %v552 = vpop.f32.mrb[0].mxu0
    %v553 = vadd.f32 %v325, %v552
    %554 = vdwg.mxu0
    %555 = vmatprep.subr.mxu0 %v101
    %556 = vmatpush1.msra.mxu0 %v100
    %557 = vmatprep.subr.mxu0 %v109
    %558 = vmatpush1.msra.mxu0 %v108
    %559 = vmatprep.subr.mxu0 %v117
    %560 = vmatpush1.msra.mxu0 %v116
    %561 = vmatprep.subr.mxu0 %v125
    %562 = vmatpush1.msra.mxu0 %v124
    %563 = vmatprep.subr.mxu0 %v133
    %564 = vmatpush1.msra.mxu0 %v132
    %565 = vmatprep.subr.mxu0 %v141
    %566 = vmatpush1.msra.mxu0 %v140
    %567 = vmatprep.subr.mxu0 %v149
    %568 = vmatpush1.msra.mxu0 %v148
    %569 = vmatprep.subr.mxu0 %v157
    %570 = vmatpush1.msra.mxu0 %v156
    %571 = vmatprep.subr.mxu0 %v165
    %572 = vmatpush1.msra.mxu0 %v164
    %573 = vmatprep.subr.mxu0 %v173
    %574 = vmatpush1.msra.mxu0 %v172
    %575 = vmatprep.subr.mxu0 %v181
    %576 = vmatpush1.msra.mxu0 %v180
    %577 = vmatprep.subr.mxu0 %v189
    %578 = vmatpush1.msra.mxu0 %v188
    %579 = vmatprep.subr.mxu0 %v197
    %580 = vmatpush1.msra.mxu0 %v196
    %581 = vmatprep.subr.mxu0 %v205
    %582 = vmatpush1.msra.mxu0 %v204
    %583 = vmatprep.subr.mxu0 %v213
    %584 = vmatpush1.msra.mxu0 %v212
    %585 = vmatprep.subr.mxu0 %v221
    %586 = vmatpush1.msra.mxu0 %v220
    %587 = vmatprep.subr.mxu0 0.0
    %588 = vmatpush1.msra.mxu0 0.0
    %589 = vmatprep.subr.mxu0 0.0
    %590 = vmatpush1.msra.mxu0 0.0
    %591 = vmatprep.subr.mxu0 0.0
    %592 = vmatpush1.msra.mxu0 0.0
    %593 = vmatprep.subr.mxu0 0.0
    %594 = vmatpush1.msra.mxu0 0.0
    %595 = vmatprep.subr.mxu0 0.0
    %596 = vmatpush1.msra.mxu0 0.0
    %597 = vmatprep.subr.mxu0 0.0
    %598 = vmatpush1.msra.mxu0 0.0
    %599 = vmatprep.subr.mxu0 0.0
    %600 = vmatpush1.msra.mxu0 0.0
    %601 = vmatprep.subr.mxu0 0.0
    %602 = vmatpush1.msra.mxu0 0.0
    %603 = vmatprep.subr.mxu0 0.0
    %604 = vmatpush1.msra.mxu0 0.0
    %605 = vmatprep.subr.mxu0 0.0
    %606 = vmatpush1.msra.mxu0 0.0
    %607 = vmatprep.subr.mxu0 0.0
    %608 = vmatpush1.msra.mxu0 0.0
    %609 = vmatprep.subr.mxu0 0.0
    %610 = vmatpush1.msra.mxu0 0.0
    %611 = vmatprep.subr.mxu0 0.0
    %612 = vmatpush1.msra.mxu0 0.0
    %613 = vmatprep.subr.mxu0 0.0
    %614 = vmatpush1.msra.mxu0 0.0
    %615 = vmatprep.subr.mxu0 0.0
    %616 = vmatpush1.msra.mxu0 0.0
    %617 = vmatprep.subr.mxu0 0.0
    %618 = vmatpush1.msra.mxu0 0.0
    %619 = vmatprep.mubr.f32.mxu0 0.0
    %620 = vmatmul.mubr.f32.gmra.mrb[0].mxu0 %v299
    %v621 = vpop.f32.mrb[0].mxu0
    %v622 = vadd.f32 %v329, %v621
    %v623 = vpop.f32.mrb[0].mxu0
    %v624 = vadd.f32 %v333, %v623
    %625 = vdwg.mxu0
    %v626 = vmax.f32 %v409, %v551
    %v627 = vmax.f32 %v411, %v553
    %v628 = vmax.f32 %v480, %v622
    %v629 = vmax.f32 %v482, %v624
    %v630 = vmax.f32 %v626, %v627
    %v631 = vmax.f32 %v628, %v629
    %v632 = vmax.f32 %v630, %v631
    %633 = vmax.xlane.f32.xlu0 %v632
    %v634 = vpop.xlane.xlu0 %633
    %v635 = vsub.f32 %v409, %v634
    %v636 = vsub.f32 %v411, %v634
    %v637 = vsub.f32 %v480, %v634
    %v638 = vsub.f32 %v482, %v634
    %v639 = vsub.f32 %v551, %v634
    %v640 = vsub.f32 %v553, %v634
    %v641 = vsub.f32 %v622, %v634
    %v642 = vsub.f32 %v624, %v634
    %v643 = vmul.f32 %v635, 1.442695
    %v644 = vpow.pop %v643
    %v645 = vmul.f32 %v636, 1.442695
    %v646 = vpow.pop %v645
    %v647 = vmul.f32 %v637, 1.442695
    %v648 = vpow.pop %v647
    %v649 = vmul.f32 %v638, 1.442695
    %v650 = vpow.pop %v649
    %v651 = vmul.f32 %v639, 1.442695
    %v652 = vpow.pop %v651
    %v653 = vmul.f32 %v640, 1.442695
    %v654 = vpow.pop %v653
    %v655 = vmul.f32 %v641, 1.442695
    %v656 = vpow.pop %v655
    %v657 = vmul.f32 %v642, 1.442695
    %v658 = vpow.pop %v657
    %v659 = vadd.f32 %v644, %v646
    %v660 = vadd.f32 %v659, %v648
    %v661 = vadd.f32 %v660, %v650
    %v662 = vadd.f32 %v661, %v652
    %v663 = vadd.f32 %v662, %v654
    %v664 = vadd.f32 %v663, %v656
    %v665 = vadd.f32 %v664, %v658
    %666 = vadd.xlane.f32.xlu0 %v665
    %v667 = vpop.xlane.xlu0 %666
    %v668 = vlog2.pop %v667
    %v669 = vmul.f32 %v668, 0.6931472
    %v670 = vsub.f32 %v635, %v669
    %v671 = vsub.f32 %v636, %v669
    %v672 = vsub.f32 %v637, %v669
    %v673 = vsub.f32 %v638, %v669
    %v674 = vsub.f32 %v639, %v669
    %v675 = vsub.f32 %v640, %v669
    %v676 = vsub.f32 %v641, %v669
    %v677 = vsub.f32 %v642, %v669
    %678 = vst [vmem:[#allocation8] sm:$0xff] %v670
    %679 = vst [vmem:[#allocation8 + $0x8] sm:$0xff] %v671
    %680 = vst [vmem:[#allocation8 + $0x10] sm:$0xff] %v672
    %681 = vst [vmem:[#allocation8 + $0x18] sm:$0xff] %v673
    %682 = vst [vmem:[#allocation8 + $0x20] sm:$0xff] %v674
    %683 = vst [vmem:[#allocation8 + $0x28] sm:$0xff] %v675
    %684 = vst [vmem:[#allocation8 + $0x30] sm:$0xff] %v676
    %685 = vst [vmem:[#allocation8 + $0x38] sm:$0xff] %v677
    // Predicated region
    $region34: #{tpu_custom_call.1} parent=1 // pred_check
      _
    $region35: #{tpu_custom_call.1} parent=1 // pred_check_branch
      %687 = sbr.rel (0) target = $region37
    $region36: #{tpu_custom_call.1} parent=1 // pred_region
      %s689 = ssub.s32 1024, 1024
      %690 = vsyncadd [#allocation4], %s689
      %s692 = sshll.u32 [#allocation8], 4
      %s693 = int_to_ptr.vmem [resolvable:$true] %s692
      %695 = dma.vmem_to_hbm [thread:$0]  %s693, 1024, %s5, [#allocation4]
    $region37: #{tpu_custom_call.1} parent=1 // pred_fallthru
      _
    // Predicated region
    $region38: #{tpu_custom_call.1} parent=1 // pred_check
      _
    $region39: #{tpu_custom_call.1} parent=1 // pred_check_branch
      %697 = sbr.rel (0) target = $region41
    $region40: #{tpu_custom_call.1} parent=1 // pred_region
      %698 = dma.done [#allocation4], 1024
    $region41: #{tpu_custom_call.1} parent=1 // pred_fallthru
      _
    %699 = vsyncpa [#allocation3], 1
    %700 = vsyncpa [#allocation6], 1
    %701 = vsyncpa [#allocation4], 1

</llo_original>
